<compile_context>
chip_gen: v6e
topology: v6e:2x2x1
jax: 0.10.0
libtpu: 0.0.40
codegen_flags: <defaults>
</compile_context>

<pallas_src>
import jax
import jax.numpy as jnp
from jax.experimental import pallas as pl
from jax.experimental.pallas import tpu as pltpu

LN_EPS = 1e-5


def _round_up(v, m):
    return ((v + m - 1) // m) * m


def _hetnet_logi_kernel(x_ref, w_ref, b_ref, o_ref):
    # x_ref: (TILE, F) ; w_ref: (F, 2) folded weight ; b_ref: (1, 2) folded bias
    # o_ref: (2, TILE) lane-dense (transposed) output tile
    x = x_ref[...].astype(jnp.float32)
    f = x.shape[-1]
    inv_f = jnp.float32(1.0 / f)

    # Centered two-pass LayerNorm statistics over the feature (lane) axis.
    mean = jnp.sum(x, axis=-1, keepdims=True) * inv_f
    xc = x - mean
    var = jnp.sum(xc * xc, axis=-1, keepdims=True) * inv_f
    xn = xc * jax.lax.rsqrt(var + jnp.float32(LN_EPS))

    # (TILE, F) @ (F, 2) + (1, 2); gamma/beta are already folded into w/b.
    y = jnp.dot(xn, w_ref[...], preferred_element_type=jnp.float32) + b_ref[...]

    # Lane-dense store: (TILE, 2) -> (2, TILE).  The relayout rides the XLU slot
    # (otherwise idle in this mem-bound kernel) and turns the writeback into an
    # unmasked contiguous DMA instead of TILE masked 8-byte partial stores.
    o_ref[...] = jnp.transpose(y).astype(o_ref.dtype)


def _pick_tile_and_vmem(n, f, tile_n):
    """Pick the row tile (multiple of 128) and a scoped-VMEM limit per chip gen."""
    lanes_f = _round_up(f, 128)          # VMEM lane-pads the x block's last dim
    x_row = lanes_f * 4                  # padded f32 bytes per x-block row
    out_row = 8 * 4                      # (2,tile) out block sublane-pads 2 -> 8
    # 2 pipeline copies of x + ~4 block-sized Mosaic intermediates
    # (x value, x-mean, xn, lane-padded row stats) + 2 copies of the out block.
    bytes_per_row = (2 + 4) * x_row + 2 * out_row
    fixed = 2 * (_round_up(f, 8) * 128 * 4 + 8 * 128 * 4)   # w + b (double-buffered)

    try:
        phys_vmem = pltpu.get_tpu_info().vmem_capacity_bytes
    except Exception:
        phys_vmem = 64 << 20             # conservative fallback (v7x per-TC)

    if phys_vmem >= (100 << 20):         # v5e / v6e: 128 MiB physical VMEM
        pipeline_budget = 48 << 20
        vmem_limit = 96 << 20
    else:                                # v7x: 64 MiB physical per TensorCore
        pipeline_budget = 24 << 20
        vmem_limit = 48 << 20

    cap = max(128, ((pipeline_budget - fixed) // bytes_per_row) // 128 * 128)
    # Keep >=4 grid steps so ("parallel",) can shard work across both v7x TCs.
    steps_cap = max(128, _round_up(pl.cdiv(n, 4), 128))

    if tile_n is None:
        tile = min(cap, steps_cap)
    else:
        tile = max(128, (min(int(tile_n), cap) // 128) * 128)
    tile = min(tile, _round_up(n, 128))  # never tile beyond the (padded) array
    return tile, vmem_limit


def hetnet_logi_forward(x, w_fold, b_fold, *, tile_n=None):
    """x: (N, F) float32; w_fold: (F, 2); b_fold: (1, 2). Returns (N, 2) float32."""
    n, f = x.shape
    tile, vmem_limit = _pick_tile_and_vmem(n, f, tile_n)
    grid = (pl.cdiv(n, tile),)           # partial last tile is masked by Pallas

    # TODO(synk): for F < 128 (e.g. F=32) the x block is 4x lane-padded in VMEM;
    # packing 128/F rows per vreg with a segmented LN reduction would restore
    # dense 128-lane loads.  The padding is budgeted above instead.
    out_t = pl.pallas_call(
        _hetnet_logi_kernel,
        out_shape=jax.ShapeDtypeStruct((2, n), jnp.float32),
        grid_spec=pl.GridSpec(
            grid=grid,
            in_specs=[
                pl.BlockSpec((tile, f), lambda i: (i, 0)),  # streaming x tile
                pl.BlockSpec((f, 2), lambda i: (0, 0)),     # folded weight (resident)
                pl.BlockSpec((1, 2), lambda i: (0, 0)),     # folded bias (resident)
            ],
            out_specs=pl.BlockSpec((2, tile), lambda i: (0, i)),  # lane-dense out
        ),
        compiler_params=pltpu.CompilerParams(
            dimension_semantics=("parallel",),
            vmem_limit_bytes=vmem_limit,
        ),
    )(x, w_fold, b_fold)
    return jnp.transpose(out_t)          # layout plumbing back to (N, 2)


def fold_params(gamma, beta, w, b):
    """Fold LayerNorm affine into the Linear layer.

    gamma, beta: (F,) ; w: (2, F) PyTorch nn.Linear weight ; b: (2,)
    Returns W' = gamma[:,None] * W^T  (F, 2)  and  b' = beta @ W^T + b  (1, 2).
    """
    gamma = gamma.reshape(-1).astype(jnp.float32)
    beta = beta.reshape(-1).astype(jnp.float32)
    w_t = jnp.transpose(w).astype(jnp.float32)       # (F, 2)
    w_fold = w_t * gamma[:, None]                    # (F, 2)
    b_fold = (beta @ w_t + b.reshape(-1)).reshape(1, 2)
    return w_fold, b_fold


def hetnet_logi(x, params, edge_index=None, *, tile_n=None):
    """Mirrors HetNetLogi.forward."""
    if edge_index is None:
        # Tuple-input path: real (possibly non-identity) mask.
        mask, x, edge_index, *_ = x
        # TODO(synk): fuse this gather into the kernel (PrefetchScalarGridSpec
        # with the mask in SMEM driving a row-gather index_map) instead of this
        # standalone XLA gather, which costs a full extra HBM read+write of x.
        x = x[mask]
    # else: mask = arange(N) -> identity gather, skipped entirely to avoid an
    # extra full read+write of x in HBM.

    w_fold, b_fold = fold_params(params["gamma"], params["beta"],
                                 params["w"], params["b"])
    return hetnet_logi_forward(x, w_fold, b_fold, tile_n=tile_n)


def init_params(key, num_feature):
    kg, kbt, kw, kb = jax.random.split(key, 4)
    bound = 1.0 / (num_feature ** 0.5)
    return {
        # PyTorch inits gamma=1, beta=0; perturb them so the affine-fold path
        # is actually exercised by the correctness check.
        "gamma": 1.0 + 0.1 * jax.random.normal(kg, (num_feature,), jnp.float32),
        "beta": 0.1 * jax.random.normal(kbt, (num_feature,), jnp.float32),
        "w": jax.random.uniform(kw, (2, num_feature), jnp.float32, -bound, bound),
        "b": jax.random.uniform(kb, (2,), jnp.float32, -bound, bound),
    }


if __name__ == "__main__":
    key = jax.random.PRNGKey(0)
    kx, kp = jax.random.split(key)

    # Small demo shapes; N deliberately NOT a multiple of the tile so the
    # auto-picked tile (128 here) exercises the cdiv / partial-tail path.
    N, F = 300, 32
    x = jax.random.normal(kx, (N, F), jnp.float32)
    edge_index = jnp.zeros((2, 8), jnp.int32)  # contents unused by forward
    params = init_params(kp, F)

    out = hetnet_logi(x, params, edge_index=edge_index)
    out = jax.block_until_ready(out)

    # Pure-JAX reference: LayerNorm (with affine) followed by Linear, exactly
    # as the PyTorch module computes it (un-folded form).
    mean = jnp.mean(x, axis=-1, keepdims=True)
    var = jnp.mean((x - mean) ** 2, axis=-1, keepdims=True)
    xn = (x - mean) / jnp.sqrt(var + LN_EPS)
    xn = xn * params["gamma"][None, :] + params["beta"][None, :]
    ref = xn @ params["w"].T + params["b"][None, :]

    assert out.shape == (N, 2)
    assert jnp.allclose(out, ref, atol=1e-4, rtol=1e-4), (
        float(jnp.max(jnp.abs(out - ref))))

    print("KERNEL_OK")
</pallas_src>

<mosaic_0001>
module attributes {stable_mosaic.version = 11 : i64} {
  func.func @_hetnet_logi_kernel(%arg0: i32, %arg1: memref<128x32xf32, #tpu.memory_space<vmem>>, %arg2: memref<32x2xf32, #tpu.memory_space<vmem>>, %arg3: memref<1x2xf32, #tpu.memory_space<vmem>>, %arg4: memref<2x128xf32, #tpu.memory_space<vmem>>) attributes {dimension_semantics = [#tpu.dimension_semantics<parallel>], iteration_bounds = array<i64: 3>, scalar_prefetch = 0 : i64, scratch_operands = 0 : i64, tpu.core_type = #tpu.core_type<tc>, window_params = [{transform_indices = @transform_0, window_bounds = array<i64: 128, 32>}, {pipeline_mode = #tpu.pipeline_mode<synchronous>, transform_indices = @transform_1, window_bounds = array<i64: 32, 2>}, {pipeline_mode = #tpu.pipeline_mode<synchronous>, transform_indices = @transform_2, window_bounds = array<i64: 1, 2>}, {transform_indices = @transform_3, window_bounds = array<i64: 2, 128>}]} {
    %c0 = arith.constant 0 : index
    %c0_0 = arith.constant 0 : index
    %0 = vector.load %arg1[%c0, %c0_0] : memref<128x32xf32, #tpu.memory_space<vmem>>, vector<128x32xf32>
    %cst = arith.constant dense<0.000000e+00> : vector<128xf32>
    %1 = vector.multi_reduction <add>, %0, %cst [1] : vector<128x32xf32> to vector<128xf32>
    %2 = vector.shape_cast %1 : vector<128xf32> to vector<128x1xf32>
    %cst_1 = arith.constant 3.125000e-02 : f32
    %3 = vector.broadcast %cst_1 : f32 to vector<128x1xf32>
    %4 = arith.mulf %2, %3 : vector<128x1xf32>
    %5 = vector.broadcast %4 : vector<128x1xf32> to vector<128x32xf32>
    %6 = arith.subf %0, %5 : vector<128x32xf32>
    %7 = arith.mulf %6, %6 : vector<128x32xf32>
    %cst_2 = arith.constant dense<0.000000e+00> : vector<128xf32>
    %8 = vector.multi_reduction <add>, %7, %cst_2 [1] : vector<128x32xf32> to vector<128xf32>
    %9 = vector.shape_cast %8 : vector<128xf32> to vector<128x1xf32>
    %cst_3 = arith.constant 3.125000e-02 : f32
    %10 = vector.broadcast %cst_3 : f32 to vector<128x1xf32>
    %11 = arith.mulf %9, %10 : vector<128x1xf32>
    %cst_4 = arith.constant 9.99999974E-6 : f32
    %12 = vector.broadcast %cst_4 : f32 to vector<128x1xf32>
    %13 = arith.addf %11, %12 : vector<128x1xf32>
    %14 = math.rsqrt %13 : vector<128x1xf32>
    %15 = vector.broadcast %14 : vector<128x1xf32> to vector<128x32xf32>
    %16 = arith.mulf %6, %15 : vector<128x32xf32>
    %c0_5 = arith.constant 0 : index
    %c0_6 = arith.constant 0 : index
    %17 = vector.load %arg2[%c0_5, %c0_6] : memref<32x2xf32, #tpu.memory_space<vmem>>, vector<32x2xf32>
    %cst_7 = arith.constant dense<0.000000e+00> : vector<128x2xf32>
    %18 = tpu.matmul %16, %17, %cst_7 {dimension_numbers = #tpu.dot_dimension_numbers<[1], [0], [0], [1], [0, 0, 1, 1], [], []>} : vector<128x32xf32>, vector<32x2xf32>, vector<128x2xf32> -> vector<128x2xf32>
    %c0_8 = arith.constant 0 : index
    %c0_9 = arith.constant 0 : index
    %19 = vector.load %arg3[%c0_8, %c0_9] : memref<1x2xf32, #tpu.memory_space<vmem>>, vector<1x2xf32>
    %20 = vector.broadcast %19 : vector<1x2xf32> to vector<128x2xf32>
    %21 = arith.addf %18, %20 : vector<128x2xf32>
    %22 = tpu.transpose %21, [1, 0] : vector<128x2xf32> -> vector<2x128xf32>
    %c0_10 = arith.constant 0 : index
    %c0_11 = arith.constant 0 : index
    %23 = vector.load %arg4[%c0_10, %c0_11] : memref<2x128xf32, #tpu.memory_space<vmem>>, vector<2x128xf32>
    tpu.vector_store %arg4[%c0_10, %c0_11], %22 {strides = array<i32>} : memref<2x128xf32, #tpu.memory_space<vmem>>, vector<2x128xf32>,
    return
  }
  func.func @transform_0(%arg0: i32) -> (i32, i32) {
    %c0_i32 = arith.constant 0 : i32
    %c0_i32_0 = arith.constant 0 : i32
    return %arg0, %c0_i32 : i32, i32
  }
  func.func @transform_1(%arg0: i32) -> (i32, i32) {
    %c0_i32 = arith.constant 0 : i32
    %c0_i32_0 = arith.constant 0 : i32
    %c0_i32_1 = arith.constant 0 : i32
    return %c0_i32, %c0_i32_0 : i32, i32
  }
  func.func @transform_2(%arg0: i32) -> (i32, i32) {
    %c0_i32 = arith.constant 0 : i32
    %c0_i32_0 = arith.constant 0 : i32
    %c0_i32_1 = arith.constant 0 : i32
    return %c0_i32, %c0_i32_0 : i32, i32
  }
  func.func @transform_3(%arg0: i32) -> (i32, i32) {
    %c0_i32 = arith.constant 0 : i32
    %c0_i32_0 = arith.constant 0 : i32
    return %c0_i32, %arg0 : i32, i32
  }
}

</mosaic_0001>

<llo_original>
// kernel: tpu_custom_call.1
$region0: #{tpu_custom_call.1}
  #allocation0 [shape = 'u32[]', space=smem, size = 0x4, offset = 0x4, fixed_abs, tag = 'smem constant byte address 0x4 - core index']
  #allocation1 [shape = 'u32[144,128]{1,0:T(1,128)}', space=vmem, size = 0x12000, scoped, tag = 'internal scratch']
  %s0 = inlined_call_operand.vmem [shape: f32[300,32], index: 0, kind: input, shape index: {}]
  %s1 = inlined_call_operand.vmem [shape: f32[32,2], index: 1, kind: input, shape index: {}]
  %s2 = inlined_call_operand.vmem [shape: f32[1,2], index: 2, kind: input, shape index: {}]
  %s3 = inlined_call_operand.hbm [shape: f32[2,300], index: 3, kind: output, shape index: {}]
  %s4 = sld [smem:[#allocation0]]
  $region45: #{tpu_custom_call.1} parent=0
    _
  %s6 = ssub.s32 1, %s4
  %s7 = scalar_select 0, %s6, %s4
  $region1: #{tpu_custom_call.1} parent=0
    #allocation2 [shape = 'u8[2048]{0}', space=vmem, size = 0x800, scoped, tag = 'output window, operand 0']
    #allocation3 [shape = 's32[2]{0}', space=sflag, size = 0x8, scoped, tag = 'scoped memory for tpu_custom_call.1']
    %8 = vsyncpa [#allocation3], 0
    %s9 = scalar_lea.sflag [#allocation3], 1
    %10 = vsyncpa %s9, 0
    loop: start=0, step=1, limit=5
    $region2: #{tpu_custom_call.1} parent=1 // loop_pre_header
      _
    $region3: #{tpu_custom_call.1} parent=1 // loop_header
      %s12 = sphi 0, %s16
      %p13 = scmp.ge.s32.totalorder %s12, 5
      %s22 = sphi 0, %s24
      %s25 = sphi 0, %s22
      %s26 = sphi 0, %s25
      %s42 = sphi 0, %s26
      %s46 = sphi 0, %s46
      %s48 = sphi 0, %s46
      %s49 = sphi 0, %s48
      %s63 = sphi 0, %s49
      %s67 = sphi 0, %s67
      %s69 = sphi 0, %s67
      %s70 = sphi 0, %s69
      %s84 = sphi 0, %s70
      %s90 = sphi 0, %s92
      %s93 = sphi 0, %s90
      %s94 = sphi 0, %s93
      %s110 = sphi 0, %s94
    $region4: #{tpu_custom_call.1} parent=1 // loop_header_branch
      %15 = sbr.rel (%p13) target = $region8
    $region5: #{tpu_custom_call.1} parent=1 // loop_body
      %s17 = ssub.s32 %s12, 1
      %s18 = ssub.s32 %s12, 2
      %s19 = sadd.s32 %s12, 1
      %s20 = ssub.s32 %s12, %s19
      %p21 = scmp.eq.s32.totalorder %s20, 0
      %s23 = sadd.s32 %s22, 1
      %s24 = scalar_select %p21, %s22, %s23
      %p27 = pneg %p21
      %p28 = scmp.eq.s32.totalorder %s12, 2
      %p29 = por %p27, %p28
      %p30 = scmp.ne.s32.totalorder %s22, %s25
      %p31 = scmp.eq.s32.totalorder %s12, 0
      %p32 = por %p30, %p31
      %p33 = scmp.ne.s32.totalorder %s22, %s25
      %p34 = scmp.eq.s32.totalorder %s17, 2
      %p35 = por %p33, %p34
      %p36 = scmp.ne.s32.totalorder %s25, %s26
      %p37 = scmp.eq.s32.totalorder %s17, 0
      %p38 = por %p36, %p37
      %p39 = scmp.ne.s32.totalorder %s25, %s26
      %p40 = scmp.eq.s32.totalorder %s18, 2
      %p41 = por %p39, %p40
      %p43 = scmp.ne.s32.totalorder %s26, %s42
      %p44 = scmp.eq.s32.totalorder %s18, 0
      %p45 = por %p43, %p44
      %s47 = sadd.s32 %s46, 1
      %p50 = scmp.eq.s32.totalorder %s12, 2
      %p51 = scmp.ne.s32.totalorder %s46, %s48
      %p52 = scmp.eq.s32.totalorder %s12, 0
      %p53 = por %p51, %p52
      %p54 = scmp.ne.s32.totalorder %s46, %s48
      %p55 = scmp.eq.s32.totalorder %s17, 2
      %p56 = por %p54, %p55
      %p57 = scmp.ne.s32.totalorder %s48, %s49
      %p58 = scmp.eq.s32.totalorder %s17, 0
      %p59 = por %p57, %p58
      %p60 = scmp.ne.s32.totalorder %s48, %s49
      %p61 = scmp.eq.s32.totalorder %s18, 2
      %p62 = por %p60, %p61
      %p64 = scmp.ne.s32.totalorder %s49, %s63
      %p65 = scmp.eq.s32.totalorder %s18, 0
      %p66 = por %p64, %p65
      %s68 = sadd.s32 %s67, 1
      %p71 = scmp.eq.s32.totalorder %s12, 2
      %p72 = scmp.ne.s32.totalorder %s67, %s69
      %p73 = scmp.eq.s32.totalorder %s12, 0
      %p74 = por %p72, %p73
      %p75 = scmp.ne.s32.totalorder %s67, %s69
      %p76 = scmp.eq.s32.totalorder %s17, 2
      %p77 = por %p75, %p76
      %p78 = scmp.ne.s32.totalorder %s69, %s70
      %p79 = scmp.eq.s32.totalorder %s17, 0
      %p80 = por %p78, %p79
      %p81 = scmp.ne.s32.totalorder %s69, %s70
      %p82 = scmp.eq.s32.totalorder %s18, 2
      %p83 = por %p81, %p82
      %p85 = scmp.ne.s32.totalorder %s70, %s84
      %p86 = scmp.eq.s32.totalorder %s18, 0
      %p87 = por %p85, %p86
      %s88 = ssub.s32 %s12, %s19
      %p89 = scmp.eq.s32.totalorder %s88, 0
      %s91 = sadd.s32 %s90, 1
      %s92 = scalar_select %p89, %s90, %s91
      %p95 = pneg %p89
      %p96 = scmp.eq.s32.totalorder %s12, 2
      %p97 = por %p95, %p96
      %p98 = scmp.ne.s32.totalorder %s90, %s93
      %p99 = scmp.eq.s32.totalorder %s12, 0
      %p100 = por %p98, %p99
      %p101 = scmp.ne.s32.totalorder %s90, %s93
      %p102 = scmp.eq.s32.totalorder %s17, 2
      %p103 = por %p101, %p102
      %p104 = scmp.ne.s32.totalorder %s93, %s94
      %p105 = scmp.eq.s32.totalorder %s17, 0
      %p106 = por %p104, %p105
      %p107 = scmp.ne.s32.totalorder %s93, %s94
      %p108 = scmp.eq.s32.totalorder %s18, 2
      %p109 = por %p107, %p108
      %p111 = scmp.ne.s32.totalorder %s94, %s110
      %p112 = scmp.eq.s32.totalorder %s18, 0
      %p113 = por %p111, %p112
      %p114 = scmp.le.s32.totalorder 1, %s12
      %p115 = scmp.lt.s32.totalorder %s12, 4
      %p116 = pnand %p114, %p115
      %p117 = pneg %p116
      // Predicated region
      $region9: #{tpu_custom_call.1} parent=5 // pred_check
        _
      $region10: #{tpu_custom_call.1} parent=5 // pred_check_branch
        %119 = sbr.rel (%p116) target = $region12
      $region11: #{tpu_custom_call.1} parent=5 // pred_region
        %s120 = ssub.s32 %s12, 1
        // Predicated region
        $region13: #{tpu_custom_call.1} parent=11 // pred_check
          %p121 = pneg %p59
        $region14: #{tpu_custom_call.1} parent=11 // pred_check_branch
          %123 = sbr.rel (%p121) target = $region16
        $region15: #{tpu_custom_call.1} parent=11 // pred_region
          _
        $region16: #{tpu_custom_call.1} parent=11 // pred_fallthru
          _
        // Predicated region
        $region17: #{tpu_custom_call.1} parent=11 // pred_check
          %p124 = pneg %p80
        $region18: #{tpu_custom_call.1} parent=11 // pred_check_branch
          %126 = sbr.rel (%p124) target = $region20
        $region19: #{tpu_custom_call.1} parent=11 // pred_region
          _
        $region20: #{tpu_custom_call.1} parent=11 // pred_fallthru
          _
      $region12: #{tpu_custom_call.1} parent=5 // pred_fallthru
        _
      %p127 = scmp.lt.s32.totalorder %s12, 3
      // Predicated region
      $region21: #{tpu_custom_call.1} parent=5 // pred_check
        %p128 = pneg %p127
      $region22: #{tpu_custom_call.1} parent=5 // pred_check_branch
        %130 = sbr.rel (%p128) target = $region24
      $region23: #{tpu_custom_call.1} parent=5 // pred_region
        // Predicated region
        $region25: #{tpu_custom_call.1} parent=23 // pred_check
          %p131 = pneg %p32
        $region26: #{tpu_custom_call.1} parent=23 // pred_check_branch
          %133 = sbr.rel (%p131) target = $region28
        $region27: #{tpu_custom_call.1} parent=23 // pred_region
          %s134 = smul.u32 16, %s12
          %s135 = ssub.s32 38, %s134
          %p136 = scmp.lt.s32.totalorder %s135, 16
          %s137 = scalar_select %p136, %s135, 16
          %s138 = smul.u32 128, %s137
          %p139 = scmp.lt.s32.totalorder %s134, 37
          %s140 = scalar_select %p139, %s134, 37
          %s141 = smul.addr %s140, 8
          %s142 = scalar_lea.vmem %s0, %s141
          %s143 = smul.u32 16, %s12
          %s144 = ssub.s32 38, %s143
          %p145 = scmp.lt.s32.totalorder %s144, 16
          %s146 = scalar_select %p145, %s144, 16
          %s147 = smul.u32 128, %s146
        $region28: #{tpu_custom_call.1} parent=23 // pred_fallthru
          _
      $region24: #{tpu_custom_call.1} parent=5 // pred_fallthru
        _
      %p148 = scmp.le.s32.totalorder 1, %s12
      %p149 = scmp.lt.s32.totalorder %s12, 4
      %p150 = pnand %p148, %p149
      %p151 = pneg %p150
      // Predicated region
      $region29: #{tpu_custom_call.1} parent=5 // pred_check
        _
      $region30: #{tpu_custom_call.1} parent=5 // pred_check_branch
        %153 = sbr.rel (%p150) target = $region32
      $region31: #{tpu_custom_call.1} parent=5 // pred_region
        %s154 = ssub.s32 %s12, 1
        %s155 = smul.u32 16, %s17
        %s156 = ssub.s32 38, %s155
        %p157 = scmp.lt.s32.totalorder %s156, 16
        %s158 = scalar_select %p157, %s156, 16
        %s159 = smul.u32 128, %s158
        %p160 = scmp.lt.s32.totalorder %s155, 37
        %s161 = scalar_select %p160, %s155, 37
        %s162 = smul.addr %s161, 8
        %s163 = scalar_lea.vmem %s0, %s162
        %p164 = pneg %p38
        %p165 = pneg %p35
        %p166 = pneg %p59
        %p167 = pneg %p56
        %p168 = pneg %p80
        %p169 = pneg %p77
        %p170 = pneg %p106
        %p171 = pneg %p103
        %s172 = sand.u32 %s93, 1
        %s173 = scalar_lea.sflag [#allocation3], %s172
        %s174 = sand.u32 %s93, 1
        %s175 = smul.addr %s174, 2
        %s176 = scalar_lea.vmem [#allocation2], %s175
        %s177 = smul.u32 16, %s17
        %s178 = ssub.s32 38, %s177
        %p179 = scmp.lt.s32.totalorder %s178, 16
        %s180 = scalar_select %p179, %s178, 16
        %s181 = smul.u32 128, %s180
        %p182 = scmp.lt.s32.totalorder %s177, 37
        %s183 = scalar_select %p182, %s177, 37
        %s184 = smul.addr %s183, 8
        %s185 = scalar_lea.vmem %s0, %s184
        %s186 = smul.u32 16, %s17
        %s187 = ssub.s32 38, %s186
        %p188 = scmp.lt.s32.totalorder %s187, 16
        %s189 = scalar_select %p188, %s187, 16
        %s190 = smul.u32 128, %s189
        %v191 = vld [vmem:[%s185] sm:$0xff]
        %v192 = vld [vmem:[%s185 + $0x8] sm:$0xff]
        %v193 = vld [vmem:[%s185 + $0x10] sm:$0xff]
        %v194 = vld [vmem:[%s185 + $0x18] sm:$0xff]
        %v195 = vld [vmem:[%s185 + $0x20] sm:$0xff]
        %v196 = vld [vmem:[%s185 + $0x28] sm:$0xff]
        %v197 = vld [vmem:[%s185 + $0x30] sm:$0xff]
        %v198 = vld [vmem:[%s185 + $0x38] sm:$0xff]
        %v199 = vld [vmem:[%s185 + $0x40] sm:$0xff]
        %v200 = vld [vmem:[%s185 + $0x48] sm:$0xff]
        %v201 = vld [vmem:[%s185 + $0x50] sm:$0xff]
        %v202 = vld [vmem:[%s185 + $0x58] sm:$0xff]
        %v203 = vld [vmem:[%s185 + $0x60] sm:$0xff]
        %v204 = vld [vmem:[%s185 + $0x68] sm:$0xff]
        %v205 = vld [vmem:[%s185 + $0x70] sm:$0xff]
        %v206 = vld [vmem:[%s185 + $0x78] sm:$0xff]
        %vm207 = vcmask 261120
        %v208 = vsel %vm207, %v191, 0.0
        %209 = vadd.xlane.f32.xlu0 %v208
        %v210 = vpop.xlane.xlu0 %209
        %v211 = vsel %vm207, %v192, 0.0
        %212 = vadd.xlane.f32.xlu0 %v211
        %v213 = vpop.xlane.xlu0 %212
        %v214 = vsel %vm207, %v193, 0.0
        %215 = vadd.xlane.f32.xlu0 %v214
        %v216 = vpop.xlane.xlu0 %215
        %v217 = vsel %vm207, %v194, 0.0
        %218 = vadd.xlane.f32.xlu0 %v217
        %v219 = vpop.xlane.xlu0 %218
        %v220 = vsel %vm207, %v195, 0.0
        %221 = vadd.xlane.f32.xlu0 %v220
        %v222 = vpop.xlane.xlu0 %221
        %v223 = vsel %vm207, %v196, 0.0
        %224 = vadd.xlane.f32.xlu0 %v223
        %v225 = vpop.xlane.xlu0 %224
        %v226 = vsel %vm207, %v197, 0.0
        %227 = vadd.xlane.f32.xlu0 %v226
        %v228 = vpop.xlane.xlu0 %227
        %v229 = vsel %vm207, %v198, 0.0
        %230 = vadd.xlane.f32.xlu0 %v229
        %v231 = vpop.xlane.xlu0 %230
        %v232 = vsel %vm207, %v199, 0.0
        %233 = vadd.xlane.f32.xlu0 %v232
        %v234 = vpop.xlane.xlu0 %233
        %v235 = vsel %vm207, %v200, 0.0
        %236 = vadd.xlane.f32.xlu0 %v235
        %v237 = vpop.xlane.xlu0 %236
        %v238 = vsel %vm207, %v201, 0.0
        %239 = vadd.xlane.f32.xlu0 %v238
        %v240 = vpop.xlane.xlu0 %239
        %v241 = vsel %vm207, %v202, 0.0
        %242 = vadd.xlane.f32.xlu0 %v241
        %v243 = vpop.xlane.xlu0 %242
        %v244 = vsel %vm207, %v203, 0.0
        %245 = vadd.xlane.f32.xlu0 %v244
        %v246 = vpop.xlane.xlu0 %245
        %v247 = vsel %vm207, %v204, 0.0
        %248 = vadd.xlane.f32.xlu0 %v247
        %v249 = vpop.xlane.xlu0 %248
        %v250 = vsel %vm207, %v205, 0.0
        %251 = vadd.xlane.f32.xlu0 %v250
        %v252 = vpop.xlane.xlu0 %251
        %v253 = vsel %vm207, %v206, 0.0
        %254 = vadd.xlane.f32.xlu0 %v253
        %v255 = vpop.xlane.xlu0 %254
        %v256 = vmul.f32 %v210, 0.03125
        %v257 = vmul.f32 %v213, 0.03125
        %v258 = vmul.f32 %v216, 0.03125
        %v259 = vmul.f32 %v219, 0.03125
        %v260 = vmul.f32 %v222, 0.03125
        %v261 = vmul.f32 %v225, 0.03125
        %v262 = vmul.f32 %v228, 0.03125
        %v263 = vmul.f32 %v231, 0.03125
        %v264 = vmul.f32 %v234, 0.03125
        %v265 = vmul.f32 %v237, 0.03125
        %v266 = vmul.f32 %v240, 0.03125
        %v267 = vmul.f32 %v243, 0.03125
        %v268 = vmul.f32 %v246, 0.03125
        %v269 = vmul.f32 %v249, 0.03125
        %v270 = vmul.f32 %v252, 0.03125
        %v271 = vmul.f32 %v255, 0.03125
        %v272 = vsub.f32 %v191, %v256
        %v273 = vsub.f32 %v192, %v257
        %v274 = vsub.f32 %v193, %v258
        %v275 = vsub.f32 %v194, %v259
        %v276 = vsub.f32 %v195, %v260
        %v277 = vsub.f32 %v196, %v261
        %v278 = vsub.f32 %v197, %v262
        %v279 = vsub.f32 %v198, %v263
        %v280 = vsub.f32 %v199, %v264
        %v281 = vsub.f32 %v200, %v265
        %v282 = vsub.f32 %v201, %v266
        %v283 = vsub.f32 %v202, %v267
        %v284 = vsub.f32 %v203, %v268
        %v285 = vsub.f32 %v204, %v269
        %v286 = vsub.f32 %v205, %v270
        %v287 = vsub.f32 %v206, %v271
        %v288 = vmul.f32 %v272, %v272
        %v289 = vmul.f32 %v273, %v273
        %v290 = vmul.f32 %v274, %v274
        %v291 = vmul.f32 %v275, %v275
        %v292 = vmul.f32 %v276, %v276
        %v293 = vmul.f32 %v277, %v277
        %v294 = vmul.f32 %v278, %v278
        %v295 = vmul.f32 %v279, %v279
        %v296 = vmul.f32 %v280, %v280
        %v297 = vmul.f32 %v281, %v281
        %v298 = vmul.f32 %v282, %v282
        %v299 = vmul.f32 %v283, %v283
        %v300 = vmul.f32 %v284, %v284
        %v301 = vmul.f32 %v285, %v285
        %v302 = vmul.f32 %v286, %v286
        %v303 = vmul.f32 %v287, %v287
        %v304 = vsel %vm207, %v288, 0.0
        %305 = vadd.xlane.f32.xlu0 %v304
        %v306 = vpop.xlane.xlu0 %305
        %v307 = vsel %vm207, %v289, 0.0
        %308 = vadd.xlane.f32.xlu0 %v307
        %v309 = vpop.xlane.xlu0 %308
        %v310 = vsel %vm207, %v290, 0.0
        %311 = vadd.xlane.f32.xlu0 %v310
        %v312 = vpop.xlane.xlu0 %311
        %v313 = vsel %vm207, %v291, 0.0
        %314 = vadd.xlane.f32.xlu0 %v313
        %v315 = vpop.xlane.xlu0 %314
        %v316 = vsel %vm207, %v292, 0.0
        %317 = vadd.xlane.f32.xlu0 %v316
        %v318 = vpop.xlane.xlu0 %317
        %v319 = vsel %vm207, %v293, 0.0
        %320 = vadd.xlane.f32.xlu0 %v319
        %v321 = vpop.xlane.xlu0 %320
        %v322 = vsel %vm207, %v294, 0.0
        %323 = vadd.xlane.f32.xlu0 %v322
        %v324 = vpop.xlane.xlu0 %323
        %v325 = vsel %vm207, %v295, 0.0
        %326 = vadd.xlane.f32.xlu0 %v325
        %v327 = vpop.xlane.xlu0 %326
        %v328 = vsel %vm207, %v296, 0.0
        %329 = vadd.xlane.f32.xlu0 %v328
        %v330 = vpop.xlane.xlu0 %329
        %v331 = vsel %vm207, %v297, 0.0
        %332 = vadd.xlane.f32.xlu0 %v331
        %v333 = vpop.xlane.xlu0 %332
        %v334 = vsel %vm207, %v298, 0.0
        %335 = vadd.xlane.f32.xlu0 %v334
        %v336 = vpop.xlane.xlu0 %335
        %v337 = vsel %vm207, %v299, 0.0
        %338 = vadd.xlane.f32.xlu0 %v337
        %v339 = vpop.xlane.xlu0 %338
        %v340 = vsel %vm207, %v300, 0.0
        %341 = vadd.xlane.f32.xlu0 %v340
        %v342 = vpop.xlane.xlu0 %341
        %v343 = vsel %vm207, %v301, 0.0
        %344 = vadd.xlane.f32.xlu0 %v343
        %v345 = vpop.xlane.xlu0 %344
        %v346 = vsel %vm207, %v302, 0.0
        %347 = vadd.xlane.f32.xlu0 %v346
        %v348 = vpop.xlane.xlu0 %347
        %v349 = vsel %vm207, %v303, 0.0
        %350 = vadd.xlane.f32.xlu0 %v349
        %v351 = vpop.xlane.xlu0 %350
        %v352 = vmul.f32 %v306, 0.03125
        %v353 = vmul.f32 %v309, 0.03125
        %v354 = vmul.f32 %v312, 0.03125
        %v355 = vmul.f32 %v315, 0.03125
        %v356 = vmul.f32 %v318, 0.03125
        %v357 = vmul.f32 %v321, 0.03125
        %v358 = vmul.f32 %v324, 0.03125
        %v359 = vmul.f32 %v327, 0.03125
        %v360 = vmul.f32 %v330, 0.03125
        %v361 = vmul.f32 %v333, 0.03125
        %v362 = vmul.f32 %v336, 0.03125
        %v363 = vmul.f32 %v339, 0.03125
        %v364 = vmul.f32 %v342, 0.03125
        %v365 = vmul.f32 %v345, 0.03125
        %v366 = vmul.f32 %v348, 0.03125
        %v367 = vmul.f32 %v351, 0.03125
        %v368 = vadd.f32 %v352, 1e-05
        %v369 = vadd.f32 %v353, 1e-05
        %v370 = vadd.f32 %v354, 1e-05
        %v371 = vadd.f32 %v355, 1e-05
        %v372 = vadd.f32 %v356, 1e-05
        %v373 = vadd.f32 %v357, 1e-05
        %v374 = vadd.f32 %v358, 1e-05
        %v375 = vadd.f32 %v359, 1e-05
        %v376 = vadd.f32 %v360, 1e-05
        %v377 = vadd.f32 %v361, 1e-05
        %v378 = vadd.f32 %v362, 1e-05
        %v379 = vadd.f32 %v363, 1e-05
        %v380 = vadd.f32 %v364, 1e-05
        %v381 = vadd.f32 %v365, 1e-05
        %v382 = vadd.f32 %v366, 1e-05
        %v383 = vadd.f32 %v367, 1e-05
        %v384 = vrsqrt.pop %v368
        %v385 = vrsqrt.pop %v369
        %v386 = vrsqrt.pop %v370
        %v387 = vrsqrt.pop %v371
        %v388 = vrsqrt.pop %v372
        %v389 = vrsqrt.pop %v373
        %v390 = vrsqrt.pop %v374
        %v391 = vrsqrt.pop %v375
        %v392 = vrsqrt.pop %v376
        %v393 = vrsqrt.pop %v377
        %v394 = vrsqrt.pop %v378
        %v395 = vrsqrt.pop %v379
        %v396 = vrsqrt.pop %v380
        %v397 = vrsqrt.pop %v381
        %v398 = vrsqrt.pop %v382
        %v399 = vrsqrt.pop %v383
        %v400 = vmul.f32 %v272, %v384
        %v401 = vmul.f32 %v273, %v385
        %v402 = vmul.f32 %v274, %v386
        %v403 = vmul.f32 %v275, %v387
        %v404 = vmul.f32 %v276, %v388
        %v405 = vmul.f32 %v277, %v389
        %v406 = vmul.f32 %v278, %v390
        %v407 = vmul.f32 %v279, %v391
        %v408 = vmul.f32 %v280, %v392
        %v409 = vmul.f32 %v281, %v393
        %v410 = vmul.f32 %v282, %v394
        %v411 = vmul.f32 %v283, %v395
        %v412 = vmul.f32 %v284, %v396
        %v413 = vmul.f32 %v285, %v397
        %v414 = vmul.f32 %v286, %v398
        %v415 = vmul.f32 %v287, %v399
        %v416 = vld [vmem:[%s1] sm:$0xff]
        %v417 = vld [vmem:[%s1 + $0x8] sm:$0xff]
        %v418 = vld [vmem:[%s1 + $0x10] sm:$0xff]
        %v419 = vld [vmem:[%s1 + $0x18] sm:$0xff]
        %v420 = vld [vmem:[%s2] sm:$0x1]
        %v422 = vlaneseq
        %v423 = vshrl.u32 %v422, 7
        %v424 = vsub.s32 0, %v423
        %v425 = vrot.slane %v420, %v424
        %v428 = vsel %vm207, %v400, 0
        %v431 = vsel %vm207, %v401, 0
        %v434 = vsel %vm207, %v402, 0
        %v437 = vsel %vm207, %v403, 0
        %v440 = vsel %vm207, %v404, 0
        %v443 = vsel %vm207, %v405, 0
        %v446 = vsel %vm207, %v406, 0
        %v449 = vsel %vm207, %v407, 0
        %v452 = vsel %vm207, %v408, 0
        %v455 = vsel %vm207, %v409, 0
        %v458 = vsel %vm207, %v410, 0
        %v461 = vsel %vm207, %v411, 0
        %v464 = vsel %vm207, %v412, 0
        %v467 = vsel %vm207, %v413, 0
        %v470 = vsel %vm207, %v414, 0
        %v473 = vsel %vm207, %v415, 0
        %475 = vmatprep.subr.mxu0 0.0
        %476 = vmatpush1.msra.mxu0 0.0
        %477 = vmatprep.subr.mxu0 0.0
        %478 = vmatpush1.msra.mxu0 0.0
        %479 = vmatprep.subr.mxu0 0.0
        %480 = vmatpush1.msra.mxu0 0.0
        %481 = vmatprep.subr.mxu0 0.0
        %482 = vmatpush1.msra.mxu0 0.0
        %483 = vmatprep.subr.mxu0 0.0
        %484 = vmatpush1.msra.mxu0 0.0
        %485 = vmatprep.subr.mxu0 0.0
        %486 = vmatpush1.msra.mxu0 0.0
        %487 = vmatprep.subr.mxu0 0.0
        %488 = vmatpush1.msra.mxu0 0.0
        %489 = vmatprep.subr.mxu0 0.0
        %490 = vmatpush1.msra.mxu0 0.0
        %491 = vmatprep.subr.mxu0 0.0
        %492 = vmatpush1.msra.mxu0 0.0
        %493 = vmatprep.subr.mxu0 0.0
        %494 = vmatpush1.msra.mxu0 0.0
        %495 = vmatprep.subr.mxu0 0.0
        %496 = vmatpush1.msra.mxu0 0.0
        %497 = vmatprep.subr.mxu0 0.0
        %498 = vmatpush1.msra.mxu0 0.0
        %499 = vmatprep.subr.mxu0 0.0
        %500 = vmatpush1.msra.mxu0 %v419
        %501 = vmatprep.subr.mxu0 0.0
        %502 = vmatpush1.msra.mxu0 %v418
        %503 = vmatprep.subr.mxu0 0.0
        %504 = vmatpush1.msra.mxu0 %v417
        %505 = vmatprep.subr.mxu0 0.0
        %506 = vmatpush1.msra.mxu0 %v416
        %507 = vmatprep.subr.mxu0 0.0
        %508 = vmatpush2.msra.mxu0 0.0
        %509 = vmatprep.subr.mxu0 0.0
        %510 = vmatpush2.msra.mxu0 0.0
        %511 = vmatprep.subr.mxu0 0.0
        %512 = vmatpush2.msra.mxu0 0.0
        %513 = vmatprep.subr.mxu0 0.0
        %514 = vmatpush2.msra.mxu0 0.0
        %515 = vmatprep.subr.mxu0 0.0
        %516 = vmatpush2.msra.mxu0 0.0
        %517 = vmatprep.subr.mxu0 0.0
        %518 = vmatpush2.msra.mxu0 0.0
        %519 = vmatprep.subr.mxu0 0.0
        %520 = vmatpush2.msra.mxu0 0.0
        %521 = vmatprep.subr.mxu0 0.0
        %522 = vmatpush2.msra.mxu0 0.0
        %523 = vmatprep.subr.mxu0 0.0
        %524 = vmatpush2.msra.mxu0 0.0
        %525 = vmatprep.subr.mxu0 0.0
        %526 = vmatpush2.msra.mxu0 0.0
        %527 = vmatprep.subr.mxu0 0.0
        %528 = vmatpush2.msra.mxu0 0.0
        %529 = vmatprep.subr.mxu0 0.0
        %530 = vmatpush2.msra.mxu0 0.0
        %531 = vmatprep.subr.mxu0 0.0
        %532 = vmatpush2.msra.mxu0 0.0
        %533 = vmatprep.subr.mxu0 0.0
        %534 = vmatpush2.msra.mxu0 0.0
        %535 = vmatprep.subr.mxu0 0.0
        %536 = vmatpush2.msra.mxu0 0.0
        %537 = vmatprep.subr.mxu0 0.0
        %538 = vmatpush2.msra.mxu0 0.0
        %539 = vmatprep.mubr.f32.mxu0 0.0
        %540 = vmatmul.mubr.f32.gmra.mxu0 %v428
        %v541 = vpop.f32.mrf.mxu0
        %v542 = vadd.f32 %v425, %v541
        %v543 = vpop.f32.mrf.mxu0
        %544 = vmatprep.mubr.f32.mxu0 0.0
        %545 = vmatmul.mubr.f32.gmra.mxu0 %v431
        %v546 = vpop.f32.mrf.mxu0
        %v547 = vadd.f32 %v425, %v546
        %v548 = vpop.f32.mrf.mxu0
        %549 = vmatprep.mubr.f32.mxu0 0.0
        %550 = vmatmul.mubr.f32.gmra.mxu0 %v434
        %v551 = vpop.f32.mrf.mxu0
        %v552 = vadd.f32 %v425, %v551
        %v553 = vpop.f32.mrf.mxu0
        %554 = vmatprep.mubr.f32.mxu0 0.0
        %555 = vmatmul.mubr.f32.gmra.mxu0 %v437
        %v556 = vpop.f32.mrf.mxu0
        %v557 = vadd.f32 %v425, %v556
        %v558 = vpop.f32.mrf.mxu0
        %559 = vmatprep.mubr.f32.mxu0 0.0
        %560 = vmatmul.mubr.f32.gmra.mxu0 %v440
        %v561 = vpop.f32.mrf.mxu0
        %v562 = vadd.f32 %v425, %v561
        %v563 = vpop.f32.mrf.mxu0
        %564 = vmatprep.mubr.f32.mxu0 0.0
        %565 = vmatmul.mubr.f32.gmra.mxu0 %v443
        %v566 = vpop.f32.mrf.mxu0
        %v567 = vadd.f32 %v425, %v566
        %v568 = vpop.f32.mrf.mxu0
        %569 = vmatprep.mubr.f32.mxu0 0.0
        %570 = vmatmul.mubr.f32.gmra.mxu0 %v446
        %v571 = vpop.f32.mrf.mxu0
        %v572 = vadd.f32 %v425, %v571
        %v573 = vpop.f32.mrf.mxu0
        %574 = vmatprep.mubr.f32.mxu0 0.0
        %575 = vmatmul.mubr.f32.gmra.mxu0 %v449
        %v576 = vpop.f32.mrf.mxu0
        %v577 = vadd.f32 %v425, %v576
        %v578 = vpop.f32.mrf.mxu0
        %579 = vmatprep.mubr.f32.mxu0 0.0
        %580 = vmatmul.mubr.f32.gmra.mxu0 %v452
        %v581 = vpop.f32.mrf.mxu0
        %v582 = vadd.f32 %v425, %v581
        %v583 = vpop.f32.mrf.mxu0
        %584 = vmatprep.mubr.f32.mxu0 0.0
        %585 = vmatmul.mubr.f32.gmra.mxu0 %v455
        %v586 = vpop.f32.mrf.mxu0
        %v587 = vadd.f32 %v425, %v586
        %v588 = vpop.f32.mrf.mxu0
        %589 = vmatprep.mubr.f32.mxu0 0.0
        %590 = vmatmul.mubr.f32.gmra.mxu0 %v458
        %v591 = vpop.f32.mrf.mxu0
        %v592 = vadd.f32 %v425, %v591
        %v593 = vpop.f32.mrf.mxu0
        %594 = vmatprep.mubr.f32.mxu0 0.0
        %595 = vmatmul.mubr.f32.gmra.mxu0 %v461
        %v596 = vpop.f32.mrf.mxu0
        %v597 = vadd.f32 %v425, %v596
        %v598 = vpop.f32.mrf.mxu0
        %599 = vmatprep.mubr.f32.mxu0 0.0
        %600 = vmatmul.mubr.f32.gmra.mxu0 %v464
        %v601 = vpop.f32.mrf.mxu0
        %v602 = vadd.f32 %v425, %v601
        %v603 = vpop.f32.mrf.mxu0
        %604 = vmatprep.mubr.f32.mxu0 0.0
        %605 = vmatmul.mubr.f32.gmra.mxu0 %v467
        %v606 = vpop.f32.mrf.mxu0
        %v607 = vadd.f32 %v425, %v606
        %v608 = vpop.f32.mrf.mxu0
        %609 = vmatprep.mubr.f32.mxu0 0.0
        %610 = vmatmul.mubr.f32.gmra.mxu0 %v470
        %v611 = vpop.f32.mrf.mxu0
        %v612 = vadd.f32 %v425, %v611
        %v613 = vpop.f32.mrf.mxu0
        %614 = vmatprep.mubr.f32.mxu0 0.0
        %615 = vmatmul.mubr.f32.gmra.mxu0 %v473
        %v616 = vpop.f32.mrf.mxu0
        %v617 = vadd.f32 %v425, %v616
        %v618 = vpop.f32.mrf.mxu0
        %619 = vdwg.mxu0
        %620 = vxpose.xlu0.b32.start [1/16] %v542, 128
        %621 = vxpose.xlu0.b32.cont [2/16] %v547, 128
        %622 = vxpose.xlu0.b32.cont [3/16] %v552, 128
        %623 = vxpose.xlu0.b32.cont [4/16] %v557, 128
        %624 = vxpose.xlu0.b32.cont [5/16] %v562, 128
        %625 = vxpose.xlu0.b32.cont [6/16] %v567, 128
        %626 = vxpose.xlu0.b32.cont [7/16] %v572, 128
        %627 = vxpose.xlu0.b32.cont [8/16] %v577, 128
        %628 = vxpose.xlu0.b32.cont [9/16] %v582, 128
        %629 = vxpose.xlu0.b32.cont [10/16] %v587, 128
        %630 = vxpose.xlu0.b32.cont [11/16] %v592, 128
        %631 = vxpose.xlu0.b32.cont [12/16] %v597, 128
        %632 = vxpose.xlu0.b32.cont [13/16] %v602, 128
        %633 = vxpose.xlu0.b32.cont [14/16] %v607, 128
        %634 = vxpose.xlu0.b32.cont [15/16] %v612, 128
        %635 = vxpose.xlu0.b32.end [16/16] %v617, 128
        %v636 = vpop.trf.xlu0
        %v637 = vpop.trf.xlu0
        %v638 = vpop.trf.xlu0
        %v639 = vpop.trf.xlu0
        %v640 = vpop.trf.xlu0
        %v641 = vpop.trf.xlu0
        %v642 = vpop.trf.xlu0
        %v643 = vpop.trf.xlu0
        %v644 = vpop.trf.xlu0
        %v645 = vpop.trf.xlu0
        %v646 = vpop.trf.xlu0
        %v647 = vpop.trf.xlu0
        %v648 = vpop.trf.xlu0
        %v649 = vpop.trf.xlu0
        %v650 = vpop.trf.xlu0
        %v651 = vpop.trf.xlu0
        %652 = vst [vmem:[%s176] sm:$0x3] %v636
        %s653 = sand.u32 %s93, 1
        %s654 = scalar_lea.sflag [#allocation3], %s653
        %s655 = sand.u32 %s93, 1
        %s656 = smul.addr %s655, 2
        %s657 = scalar_lea.vmem [#allocation2], %s656
        // Predicated region
        $region33: #{tpu_custom_call.1} parent=31 // pred_check
          %p658 = pneg %p103
        $region34: #{tpu_custom_call.1} parent=31 // pred_check_branch
          %660 = sbr.rel (%p658) target = $region36
        $region35: #{tpu_custom_call.1} parent=31 // pred_region
          %s662 = ssub.s32 32, 32
          %663 = vsyncadd %s654, %s662
          %s664 = smul.addr %s17, 32
          %s665 = scalar_lea.hbm %s3, %s664
          %s667 = sshll.u32 %s657, 4
          %s668 = int_to_ptr.vmem [resolvable:$true] %s667
          %670 = dma.vmem_to_hbm [thread:$0]  %s668, 32, %s665, %s654
        $region36: #{tpu_custom_call.1} parent=31 // pred_fallthru
          _
      $region32: #{tpu_custom_call.1} parent=5 // pred_fallthru
        _
      %p671 = scmp.le.s32.totalorder 2, %s12
      // Predicated region
      $region37: #{tpu_custom_call.1} parent=5 // pred_check
        %p672 = pneg %p671
      $region38: #{tpu_custom_call.1} parent=5 // pred_check_branch
        %674 = sbr.rel (%p672) target = $region40
      $region39: #{tpu_custom_call.1} parent=5 // pred_region
        %s675 = ssub.s32 %s12, 2
        // Predicated region
        $region41: #{tpu_custom_call.1} parent=39 // pred_check
          %p676 = pneg %p109
        $region42: #{tpu_custom_call.1} parent=39 // pred_check_branch
          %678 = sbr.rel (%p676) target = $region44
        $region43: #{tpu_custom_call.1} parent=39 // pred_region
          %s679 = sand.u32 %s94, 1
          %s680 = scalar_lea.sflag [#allocation3], %s679
          %s681 = sand.u32 %s94, 1
          %s682 = smul.addr %s681, 2
          %s683 = scalar_lea.vmem [#allocation2], %s682
          %684 = dma.done %s680, 32
        $region44: #{tpu_custom_call.1} parent=39 // pred_fallthru
          _
      $region40: #{tpu_custom_call.1} parent=5 // pred_fallthru
        _
    $region6: #{tpu_custom_call.1} parent=1 // loop_footer
      %s16 = sadd.s32 1, %s12
    $region7: #{tpu_custom_call.1} parent=1 // loop_footer_branch
      %11 = sbr.rel target = $region3
    $region8: #{tpu_custom_call.1} parent=1 // loop_exit
      _
    %685 = vsyncpa [#allocation3], 1
    %s686 = scalar_lea.sflag [#allocation3], 1
    %687 = vsyncpa %s686, 1

</llo_original>
